<compile_context>
chip_gen: v5e
topology: v5e:2x2
jax: 0.10.0
libtpu: 0.0.40
codegen_flags: <defaults>
</compile_context>

<pallas_src>
import functools

import jax
import jax.numpy as jnp
from jax.experimental import pallas as pl
from jax.experimental.pallas import tpu as pltpu

RRELU_SLOPE = (1.0 / 8.0 + 1.0 / 3.0) / 2.0  # nn.RReLU eval-mode slope
NORM_EPS = 1e-12                             # F.normalize default eps


def _rrelu(x):
    # For 0 < slope < 1: max(x, slope*x) == where(x >= 0, x, slope*x); mul+max
    # is cheaper on the VALU than compare+select.
    return jnp.maximum(x, x * RRELU_SLOPE)


def _round_up(v, m):
    return (v + m - 1) // m * m


def _disc_kernel(x_ref,
                 w1_ref, b1_ref,
                 w2_ref, b2_ref,
                 w3_ref, b3_ref,
                 w4_ref, b4_ref,
                 out_ref, *, n_valid):
    # x_ref : (TB, Np, Dp) block of batch elements (compute dtype; Np, Dp padded)
    # wX_ref: (in_p, out_p) pre-transposed effective weights (compute dtype),
    # bX_ref: (1, out_p) f32.  out_ref: (TB, Dp) lane-dense f32 output slab.
    tb, n, dp = x_ref.shape
    x = x_ref[...]                                    # (TB, Np, Dp)
    xf = x.reshape(tb * n, dp)                        # free view: Np % 8 == 0

    cd = w1_ref.dtype                                 # compute dtype of matmul chain
    h = _rrelu(jnp.dot(xf, w1_ref[...],
                       preferred_element_type=jnp.float32) + b1_ref[...])
    h = _rrelu(jnp.dot(h.astype(cd), w2_ref[...],
                       preferred_element_type=jnp.float32) + b2_ref[...])
    h = _rrelu(jnp.dot(h.astype(cd), w3_ref[...],
                       preferred_element_type=jnp.float32) + b3_ref[...])
    mlp = _rrelu(jnp.dot(h.astype(cd), w4_ref[...],
                         preferred_element_type=jnp.float32) + b4_ref[...])  # (TB*Np, Dp) f32
    mlp = mlp.reshape(tb, n, dp)

    x32 = x.astype(jnp.float32)                       # pooling math in f32

    # Softmax over the N axis (PyTorch dim=1), fused with attention pooling:
    #   soft = e / Z ; sem = sum(soft * x, N) == sum(e * x, N) / Z
    m = jnp.max(mlp, axis=1, keepdims=True)           # (TB, 1, Dp)
    e = jnp.exp(mlp - m)                               # (TB, Np, Dp)
    if n != n_valid:                                   # static: mask padded N rows
        row = jax.lax.broadcasted_iota(jnp.int32, (tb, n, dp), 1)
        e = jnp.where(row < n_valid, e, 0.0)
    z = jnp.sum(e, axis=1)                             # (TB, Dp)
    num = jnp.sum(e * x32, axis=1)                     # (TB, Dp)
    sem = num / z                                      # exact divide (tiny tile)

    # L2 normalize over the feature dim (F.normalize(dim=1)):
    #   sem / max(||sem||, eps) == sem * rsqrt(max(sum(sem^2), eps^2))
    sumsq = jnp.sum(sem * sem, axis=1, keepdims=True)  # (TB, 1)
    out_ref[...] = (sem * jax.lax.rsqrt(jnp.maximum(sumsq, NORM_EPS * NORM_EPS))
                    ).astype(out_ref.dtype)


def _tpu_memory_config():
    """Generation-aware (vmem_limit_bytes, chooser_budget_bytes, min_grid_steps)."""
    try:
        cap = int(pltpu.get_tpu_info().vmem_capacity_bytes)
    except Exception:
        cap = 0
    if cap >= (96 << 20):
        # v5e / v6e class: 128 MiB physical VMEM, single TensorCore.
        return 96 << 20, 64 << 20, 1
    # v7x class (64 MiB physical, 2 TensorCores) or unknown: conservative limit,
    # and prefer >=2 grid steps so ('parallel',) can occupy both TCs.
    return 48 << 20, 32 << 20, 2


def _choose_tb(B, Np, Dp, Hp, x_itemsize, weight_bytes,
               target_rows, vmem_budget_bytes, min_grid_steps):
    """Largest batch tile TB (divisor of B, multiple of 8 or == B) whose
    per-step working set fits the VMEM budget and whose flattened M dim stays
    near target_rows.  Prefers grid length >= min_grid_steps when possible."""
    big = max(Dp, Hp)

    def working_set(tb):
        rows = tb * Np
        return (2 * rows * Dp * x_itemsize      # double-buffered x input blocks
                + 4 * rows * big * 4            # live f32 intermediates (h chain, mlp, e, x32)
                + weight_bytes                  # single-buffered resident weights + biases
                + 2 * tb * Dp * 4)              # double-buffered output slab

    def ok(tb):
        return tb * Np <= max(target_rows, Np) and working_set(tb) <= vmem_budget_bytes

    divisors = [d for d in range(1, B + 1) if B % d == 0]
    # Sublane-dense output blocks: TB multiple of 8, or the full batch.
    preferred = [d for d in divisors if d % 8 == 0 or d == B] or divisors
    fitting = [d for d in preferred if ok(d)]
    if not fitting:
        fitting = [d for d in divisors if ok(d)] or [1]
    multi = [d for d in fitting if B // d >= min_grid_steps]
    return max(multi) if multi else max(fitting)


@functools.partial(jax.jit, static_argnames=("compute_dtype",))
def discrimination_forward(x, params, compute_dtype=jnp.bfloat16):
    """x: (B, N, D) float32. params: dict of effective (unpadded) weights/biases.

    Default compute_dtype=bfloat16 (MXU throughput + halved x DMA; f32 accum).
    Use compute_dtype=jnp.float32 for bit-tight fidelity to the f32 reference.
    """
    B, N, D = x.shape
    H = params["w1"].shape[1]

    Dp = _round_up(D, 128)   # lane-dense feature dims
    Hp = _round_up(H, 128)
    Np = _round_up(N, 8)     # keep the (TB,N,Dp)->(TB*N,Dp) reshape a free view

    def pad_w(w, rows, cols):
        return jnp.pad(w, ((0, rows - w.shape[0]), (0, cols - w.shape[1]))
                       ).astype(compute_dtype)

    def pad_b(b, cols):
        return jnp.pad(b, ((0, 0), (0, cols - b.shape[1]))).astype(jnp.float32)

    w1 = pad_w(params["w1"], Dp, Hp); b1 = pad_b(params["b1"], Hp)
    w2 = pad_w(params["w2"], Hp, Hp); b2 = pad_b(params["b2"], Hp)
    w3 = pad_w(params["w3"], Hp, Hp); b3 = pad_b(params["b3"], Dp if False else Hp)
    w4 = pad_w(params["w4"], Hp, Dp); b4 = pad_b(params["b4"], Dp)

    # x is the only per-step HBM stream: cast it to the compute dtype (bf16
    # halves DMA bytes and the (TB,Np,Dp) VMEM block); kernel upcasts to f32
    # for the pooling / normalization math.
    x_p = jnp.pad(x, ((0, 0), (0, Np - N), (0, Dp - D))).astype(compute_dtype)

    vmem_limit, vmem_budget, min_grid_steps = _tpu_memory_config()
    x_itemsize = jnp.dtype(compute_dtype).itemsize
    weight_bytes = sum(int(a.size) * a.dtype.itemsize
                       for a in (w1, w2, w3, w4, b1, b2, b3, b4))
    TB = _choose_tb(B, Np, Dp, Hp, x_itemsize, weight_bytes,
                    target_rows=512, vmem_budget_bytes=vmem_budget,
                    min_grid_steps=min_grid_steps)

    # Constant-index operands: stage once, full array resident in VMEM
    # (single-buffered — no per-step double-buffer waste).
    const_vmem = pl.BlockSpec(memory_space=pltpu.MemorySpace.VMEM)

    out_p = pl.pallas_call(
        functools.partial(_disc_kernel, n_valid=N),
        out_shape=jax.ShapeDtypeStruct((B, Dp), jnp.float32),
        grid_spec=pltpu.PrefetchScalarGridSpec(
            num_scalar_prefetch=0,
            grid=(B // TB,),
            in_specs=[
                pl.BlockSpec((TB, Np, Dp), lambda b: (b, 0, 0)),
                const_vmem, const_vmem,
                const_vmem, const_vmem,
                const_vmem, const_vmem,
                const_vmem, const_vmem,
            ],
            out_specs=pl.BlockSpec((TB, Dp), lambda b: (b, 0)),
        ),
        compiler_params=pltpu.CompilerParams(
            dimension_semantics=("parallel",),
            vmem_limit_bytes=vmem_limit,
        ),
    )(x_p, w1, b1, w2, b2, w3, b3, w4, b4)

    return out_p[:, :D]


def _init_weight_norm_linear(key, in_dim, out_dim):
    """Mimic weight_norm(nn.Linear(in_dim, out_dim), dim=None) at init.

    Returns the pre-transposed effective weight (in_dim, out_dim) and bias (1, out_dim).
    """
    kv, kb = jax.random.split(key)
    v = jax.random.normal(kv, (out_dim, in_dim), jnp.float32) * 0.05   # weight_v
    g = jnp.sqrt(jnp.sum(v * v))                                       # weight_g (scalar, dim=None)
    w_eff = g * v / jnp.sqrt(jnp.sum(v * v))                           # == v at init, kept for fidelity
    b = jax.random.normal(kb, (out_dim,), jnp.float32) * 0.01
    return w_eff.T, b.reshape(1, out_dim)


def _reference_forward(x, params):
    """Pure-JAX f32 reference of the PyTorch forward (eval-mode RReLU)."""
    h = x
    for wi, bi in (("w1", "b1"), ("w2", "b2"), ("w3", "b3"), ("w4", "b4")):
        h = _rrelu(h @ params[wi] + params[bi])
    soft = jax.nn.softmax(h, axis=1)
    sem = jnp.sum(soft * x, axis=1)
    nrm = jnp.sqrt(jnp.sum(sem * sem, axis=1, keepdims=True))
    return sem / jnp.maximum(nrm, NORM_EPS)


if __name__ == "__main__":
    # Small shapes consistent with the module: in_dim = out_dim = D, hid_dim = H.
    B, N, D, H = 2, 8, 32, 32

    key = jax.random.PRNGKey(0)
    kx, k1, k2, k3, k4 = jax.random.split(key, 5)

    x = jax.random.normal(kx, (B, N, D), jnp.float32)

    w1, b1 = _init_weight_norm_linear(k1, D, H)
    w2, b2 = _init_weight_norm_linear(k2, H, H)
    w3, b3 = _init_weight_norm_linear(k3, H, H)
    w4, b4 = _init_weight_norm_linear(k4, H, D)
    params = dict(w1=w1, b1=b1, w2=w2, b2=b2, w3=w3, b3=b3, w4=w4, b4=b4)

    # Default (bf16 matmuls + bf16 x streaming) path.
    out_bf16 = jax.block_until_ready(discrimination_forward(x, params))
    # Float32 path for a tight correctness check against the f32 reference.
    out_f32 = jax.block_until_ready(
        discrimination_forward(x, params, compute_dtype=jnp.float32))

    ref = _reference_forward(x, params)
    assert out_bf16.shape == (B, D) and out_f32.shape == (B, D)
    assert jnp.allclose(out_f32, ref, atol=1e-5, rtol=1e-5), \
        "f32 kernel mismatch vs pure-JAX reference"
    assert jnp.allclose(out_bf16, ref, atol=2e-2, rtol=2e-2), \
        "bf16 kernel mismatch vs pure-JAX reference"

    print("KERNEL_OK")
</pallas_src>

<mosaic_0001>
module attributes {stable_mosaic.version = 11 : i64} {
  func.func @_disc_kernel(%arg0: i32, %arg1: memref<2x8x128xbf16, #tpu.memory_space<vmem>>, %arg2: memref<128x128xbf16, #tpu.memory_space<vmem>>, %arg3: memref<1x128xf32, #tpu.memory_space<vmem>>, %arg4: memref<128x128xbf16, #tpu.memory_space<vmem>>, %arg5: memref<1x128xf32, #tpu.memory_space<vmem>>, %arg6: memref<128x128xbf16, #tpu.memory_space<vmem>>, %arg7: memref<1x128xf32, #tpu.memory_space<vmem>>, %arg8: memref<128x128xbf16, #tpu.memory_space<vmem>>, %arg9: memref<1x128xf32, #tpu.memory_space<vmem>>, %arg10: memref<2x128xf32, #tpu.memory_space<vmem>>) attributes {dimension_semantics = [#tpu.dimension_semantics<parallel>], iteration_bounds = array<i64: 1>, scalar_prefetch = 0 : i64, scratch_operands = 0 : i64, tpu.core_type = #tpu.core_type<tc>, window_params = [{transform_indices = @transform_0, window_bounds = array<i64: 2, 8, 128>}, {pipeline_mode = #tpu.pipeline_mode<synchronous>, transform_indices = @transform_1, window_bounds = array<i64: 128, 128>}, {pipeline_mode = #tpu.pipeline_mode<synchronous>, transform_indices = @transform_2, window_bounds = array<i64: 1, 128>}, {pipeline_mode = #tpu.pipeline_mode<synchronous>, transform_indices = @transform_3, window_bounds = array<i64: 128, 128>}, {pipeline_mode = #tpu.pipeline_mode<synchronous>, transform_indices = @transform_4, window_bounds = array<i64: 1, 128>}, {pipeline_mode = #tpu.pipeline_mode<synchronous>, transform_indices = @transform_5, window_bounds = array<i64: 128, 128>}, {pipeline_mode = #tpu.pipeline_mode<synchronous>, transform_indices = @transform_6, window_bounds = array<i64: 1, 128>}, {pipeline_mode = #tpu.pipeline_mode<synchronous>, transform_indices = @transform_7, window_bounds = array<i64: 128, 128>}, {pipeline_mode = #tpu.pipeline_mode<synchronous>, transform_indices = @transform_8, window_bounds = array<i64: 1, 128>}, {transform_indices = @transform_9, window_bounds = array<i64: 2, 128>}]} {
    %c0 = arith.constant 0 : index
    %c0_0 = arith.constant 0 : index
    %c0_1 = arith.constant 0 : index
    %0 = vector.load %arg1[%c0, %c0_0, %c0_1] : memref<2x8x128xbf16, #tpu.memory_space<vmem>>, vector<2x8x128xbf16>
    %1 = vector.shape_cast %0 : vector<2x8x128xbf16> to vector<16x128xbf16>
    %c0_2 = arith.constant 0 : index
    %c0_3 = arith.constant 0 : index
    %2 = vector.load %arg2[%c0_2, %c0_3] : memref<128x128xbf16, #tpu.memory_space<vmem>>, vector<128x128xbf16>
    %cst = arith.constant dense<0.000000e+00> : vector<16x128xf32>
    %3 = tpu.matmul %1, %2, %cst {dimension_numbers = #tpu.dot_dimension_numbers<[1], [0], [0], [1], [0, 0, 1, 1], [], []>} : vector<16x128xbf16>, vector<128x128xbf16>, vector<16x128xf32> -> vector<16x128xf32>
    %c0_4 = arith.constant 0 : index
    %c0_5 = arith.constant 0 : index
    %4 = vector.load %arg3[%c0_4, %c0_5] : memref<1x128xf32, #tpu.memory_space<vmem>>, vector<1x128xf32>
    %5 = vector.broadcast %4 : vector<1x128xf32> to vector<16x128xf32>
    %6 = arith.addf %3, %5 : vector<16x128xf32>
    %cst_6 = arith.constant 0.229166672 : f32
    %7 = vector.broadcast %cst_6 : f32 to vector<16x128xf32>
    %8 = arith.mulf %6, %7 : vector<16x128xf32>
    %9 = arith.maximumf %6, %8 : vector<16x128xf32>
    %10 = arith.truncf %9 : vector<16x128xf32> to vector<16x128xbf16>
    %c0_7 = arith.constant 0 : index
    %c0_8 = arith.constant 0 : index
    %11 = vector.load %arg4[%c0_7, %c0_8] : memref<128x128xbf16, #tpu.memory_space<vmem>>, vector<128x128xbf16>
    %cst_9 = arith.constant dense<0.000000e+00> : vector<16x128xf32>
    %12 = tpu.matmul %10, %11, %cst_9 {dimension_numbers = #tpu.dot_dimension_numbers<[1], [0], [0], [1], [0, 0, 1, 1], [], []>} : vector<16x128xbf16>, vector<128x128xbf16>, vector<16x128xf32> -> vector<16x128xf32>
    %c0_10 = arith.constant 0 : index
    %c0_11 = arith.constant 0 : index
    %13 = vector.load %arg5[%c0_10, %c0_11] : memref<1x128xf32, #tpu.memory_space<vmem>>, vector<1x128xf32>
    %14 = vector.broadcast %13 : vector<1x128xf32> to vector<16x128xf32>
    %15 = arith.addf %12, %14 : vector<16x128xf32>
    %cst_12 = arith.constant 0.229166672 : f32
    %16 = vector.broadcast %cst_12 : f32 to vector<16x128xf32>
    %17 = arith.mulf %15, %16 : vector<16x128xf32>
    %18 = arith.maximumf %15, %17 : vector<16x128xf32>
    %19 = arith.truncf %18 : vector<16x128xf32> to vector<16x128xbf16>
    %c0_13 = arith.constant 0 : index
    %c0_14 = arith.constant 0 : index
    %20 = vector.load %arg6[%c0_13, %c0_14] : memref<128x128xbf16, #tpu.memory_space<vmem>>, vector<128x128xbf16>
    %cst_15 = arith.constant dense<0.000000e+00> : vector<16x128xf32>
    %21 = tpu.matmul %19, %20, %cst_15 {dimension_numbers = #tpu.dot_dimension_numbers<[1], [0], [0], [1], [0, 0, 1, 1], [], []>} : vector<16x128xbf16>, vector<128x128xbf16>, vector<16x128xf32> -> vector<16x128xf32>
    %c0_16 = arith.constant 0 : index
    %c0_17 = arith.constant 0 : index
    %22 = vector.load %arg7[%c0_16, %c0_17] : memref<1x128xf32, #tpu.memory_space<vmem>>, vector<1x128xf32>
    %23 = vector.broadcast %22 : vector<1x128xf32> to vector<16x128xf32>
    %24 = arith.addf %21, %23 : vector<16x128xf32>
    %cst_18 = arith.constant 0.229166672 : f32
    %25 = vector.broadcast %cst_18 : f32 to vector<16x128xf32>
    %26 = arith.mulf %24, %25 : vector<16x128xf32>
    %27 = arith.maximumf %24, %26 : vector<16x128xf32>
    %28 = arith.truncf %27 : vector<16x128xf32> to vector<16x128xbf16>
    %c0_19 = arith.constant 0 : index
    %c0_20 = arith.constant 0 : index
    %29 = vector.load %arg8[%c0_19, %c0_20] : memref<128x128xbf16, #tpu.memory_space<vmem>>, vector<128x128xbf16>
    %cst_21 = arith.constant dense<0.000000e+00> : vector<16x128xf32>
    %30 = tpu.matmul %28, %29, %cst_21 {dimension_numbers = #tpu.dot_dimension_numbers<[1], [0], [0], [1], [0, 0, 1, 1], [], []>} : vector<16x128xbf16>, vector<128x128xbf16>, vector<16x128xf32> -> vector<16x128xf32>
    %c0_22 = arith.constant 0 : index
    %c0_23 = arith.constant 0 : index
    %31 = vector.load %arg9[%c0_22, %c0_23] : memref<1x128xf32, #tpu.memory_space<vmem>>, vector<1x128xf32>
    %32 = vector.broadcast %31 : vector<1x128xf32> to vector<16x128xf32>
    %33 = arith.addf %30, %32 : vector<16x128xf32>
    %cst_24 = arith.constant 0.229166672 : f32
    %34 = vector.broadcast %cst_24 : f32 to vector<16x128xf32>
    %35 = arith.mulf %33, %34 : vector<16x128xf32>
    %36 = arith.maximumf %33, %35 : vector<16x128xf32>
    %37 = vector.shape_cast %36 : vector<16x128xf32> to vector<2x8x128xf32>
    %38 = arith.extf %0 : vector<2x8x128xbf16> to vector<2x8x128xf32>
    %cst_25 = arith.constant dense<0xFF800000> : vector<2x128xf32>
    %39 = vector.multi_reduction <maximumf>, %37, %cst_25 [1] : vector<2x8x128xf32> to vector<2x128xf32>
    %40 = vector.shape_cast %39 : vector<2x128xf32> to vector<2x1x128xf32>
    %41 = vector.broadcast %40 : vector<2x1x128xf32> to vector<2x8x128xf32>
    %42 = arith.subf %37, %41 : vector<2x8x128xf32>
    %43 = math.exp %42 : vector<2x8x128xf32>
    %cst_26 = arith.constant dense<0.000000e+00> : vector<2x128xf32>
    %44 = vector.multi_reduction <add>, %43, %cst_26 [1] : vector<2x8x128xf32> to vector<2x128xf32>
    %45 = arith.mulf %43, %38 : vector<2x8x128xf32>
    %cst_27 = arith.constant dense<0.000000e+00> : vector<2x128xf32>
    %46 = vector.multi_reduction <add>, %45, %cst_27 [1] : vector<2x8x128xf32> to vector<2x128xf32>
    %47 = arith.divf %46, %44 : vector<2x128xf32>
    %48 = arith.mulf %47, %47 : vector<2x128xf32>
    %cst_28 = arith.constant dense<0.000000e+00> : vector<2xf32>
    %49 = vector.multi_reduction <add>, %48, %cst_28 [1] : vector<2x128xf32> to vector<2xf32>
    %50 = vector.shape_cast %49 : vector<2xf32> to vector<2x1xf32>
    %cst_29 = arith.constant 1.000000e-24 : f32
    %51 = vector.broadcast %cst_29 : f32 to vector<2x1xf32>
    %52 = arith.maximumf %50, %51 : vector<2x1xf32>
    %53 = math.rsqrt %52 : vector<2x1xf32>
    %54 = vector.broadcast %53 : vector<2x1xf32> to vector<2x128xf32>
    %55 = arith.mulf %47, %54 : vector<2x128xf32>
    %c0_30 = arith.constant 0 : index
    %c0_31 = arith.constant 0 : index
    %56 = vector.load %arg10[%c0_30, %c0_31] : memref<2x128xf32, #tpu.memory_space<vmem>>, vector<2x128xf32>
    tpu.vector_store %arg10[%c0_30, %c0_31], %55 {strides = array<i32>} : memref<2x128xf32, #tpu.memory_space<vmem>>, vector<2x128xf32>,
    return
  }
  func.func @transform_0(%arg0: i32) -> (i32, i32, i32) {
    %c0_i32 = arith.constant 0 : i32
    %c0_i32_0 = arith.constant 0 : i32
    %c0_i32_1 = arith.constant 0 : i32
    return %arg0, %c0_i32, %c0_i32_0 : i32, i32, i32
  }
  func.func @transform_1(%arg0: i32) -> (i32, i32) {
    %c0_i32 = arith.constant 0 : i32
    %c0_i32_0 = arith.constant 0 : i32
    %c0_i32_1 = arith.constant 0 : i32
    return %c0_i32, %c0_i32_0 : i32, i32
  }
  func.func @transform_2(%arg0: i32) -> (i32, i32) {
    %c0_i32 = arith.constant 0 : i32
    %c0_i32_0 = arith.constant 0 : i32
    %c0_i32_1 = arith.constant 0 : i32
    return %c0_i32, %c0_i32_0 : i32, i32
  }
  func.func @transform_3(%arg0: i32) -> (i32, i32) {
    %c0_i32 = arith.constant 0 : i32
    %c0_i32_0 = arith.constant 0 : i32
    %c0_i32_1 = arith.constant 0 : i32
    return %c0_i32, %c0_i32_0 : i32, i32
  }
  func.func @transform_4(%arg0: i32) -> (i32, i32) {
    %c0_i32 = arith.constant 0 : i32
    %c0_i32_0 = arith.constant 0 : i32
    %c0_i32_1 = arith.constant 0 : i32
    return %c0_i32, %c0_i32_0 : i32, i32
  }
  func.func @transform_5(%arg0: i32) -> (i32, i32) {
    %c0_i32 = arith.constant 0 : i32
    %c0_i32_0 = arith.constant 0 : i32
    %c0_i32_1 = arith.constant 0 : i32
    return %c0_i32, %c0_i32_0 : i32, i32
  }
  func.func @transform_6(%arg0: i32) -> (i32, i32) {
    %c0_i32 = arith.constant 0 : i32
    %c0_i32_0 = arith.constant 0 : i32
    %c0_i32_1 = arith.constant 0 : i32
    return %c0_i32, %c0_i32_0 : i32, i32
  }
  func.func @transform_7(%arg0: i32) -> (i32, i32) {
    %c0_i32 = arith.constant 0 : i32
    %c0_i32_0 = arith.constant 0 : i32
    %c0_i32_1 = arith.constant 0 : i32
    return %c0_i32, %c0_i32_0 : i32, i32
  }
  func.func @transform_8(%arg0: i32) -> (i32, i32) {
    %c0_i32 = arith.constant 0 : i32
    %c0_i32_0 = arith.constant 0 : i32
    %c0_i32_1 = arith.constant 0 : i32
    return %c0_i32, %c0_i32_0 : i32, i32
  }
  func.func @transform_9(%arg0: i32) -> (i32, i32) {
    %c0_i32 = arith.constant 0 : i32
    %c0_i32_0 = arith.constant 0 : i32
    return %arg0, %c0_i32 : i32, i32
  }
}

</mosaic_0001>

<llo_original>
// kernel: discrimination_forward.1
$region0: #{discrimination_forward.1}
  #allocation0 [shape = 'u32[]', space=smem, size = 0x4, offset = 0x4, fixed_abs, tag = 'smem constant byte address 0x4 - core index']
  #allocation1 [shape = 'u32[72,128]{1,0:T(1,128)}', space=vmem, size = 0x9000, scoped, tag = 'internal scratch']
  %s0 = inlined_call_operand.vmem [shape: bf16[2,8,128], index: 0, kind: input, shape index: {}]
  %s1 = inlined_call_operand.vmem [shape: bf16[128,128], index: 1, kind: input, shape index: {}]
  %s2 = inlined_call_operand.vmem [shape: f32[1,128], index: 2, kind: input, shape index: {}]
  %s3 = inlined_call_operand.vmem [shape: bf16[128,128], index: 3, kind: input, shape index: {}]
  %s4 = inlined_call_operand.vmem [shape: f32[1,128], index: 4, kind: input, shape index: {}]
  %s5 = inlined_call_operand.vmem [shape: bf16[128,128], index: 5, kind: input, shape index: {}]
  %s6 = inlined_call_operand.vmem [shape: f32[1,128], index: 6, kind: input, shape index: {}]
  %s7 = inlined_call_operand.vmem [shape: bf16[128,128], index: 7, kind: input, shape index: {}]
  %s8 = inlined_call_operand.vmem [shape: f32[1,128], index: 8, kind: input, shape index: {}]
  %s9 = inlined_call_operand.hbm [shape: f32[2,128], index: 9, kind: output, shape index: {}]
  %s10 = sld [smem:[#allocation0]]
  $region46: #{discrimination_forward.1} parent=0
    _
  %s12 = ssub.s32 1, %s10
  %s13 = scalar_select 0, %s12, %s10
  $region1: #{discrimination_forward.1} parent=0
    #allocation2 [shape = 'u8[1024]{0}', space=vmem, size = 0x400, scoped, tag = 'output window, operand 0, single buffered']
    #allocation3 [shape = 's32[1]{0}', space=sflag, size = 0x4, scoped, tag = 'scoped memory for discrimination_forward.1']
    %14 = vsyncpa [#allocation3], 0
    // Predicated region
    $region2: #{discrimination_forward.1} parent=1 // pred_check
      _
    $region3: #{discrimination_forward.1} parent=1 // pred_check_branch
      %16 = sbr.rel (0) target = $region5
    $region4: #{discrimination_forward.1} parent=1 // pred_region
      _
    $region5: #{discrimination_forward.1} parent=1 // pred_fallthru
      _
    // Predicated region
    $region6: #{discrimination_forward.1} parent=1 // pred_check
      _
    $region7: #{discrimination_forward.1} parent=1 // pred_check_branch
      %18 = sbr.rel (0) target = $region9
    $region8: #{discrimination_forward.1} parent=1 // pred_region
      _
    $region9: #{discrimination_forward.1} parent=1 // pred_fallthru
      _
    // Predicated region
    $region10: #{discrimination_forward.1} parent=1 // pred_check
      _
    $region11: #{discrimination_forward.1} parent=1 // pred_check_branch
      %20 = sbr.rel (0) target = $region13
    $region12: #{discrimination_forward.1} parent=1 // pred_region
      _
    $region13: #{discrimination_forward.1} parent=1 // pred_fallthru
      _
    // Predicated region
    $region14: #{discrimination_forward.1} parent=1 // pred_check
      _
    $region15: #{discrimination_forward.1} parent=1 // pred_check_branch
      %22 = sbr.rel (0) target = $region17
    $region16: #{discrimination_forward.1} parent=1 // pred_region
      _
    $region17: #{discrimination_forward.1} parent=1 // pred_fallthru
      _
    // Predicated region
    $region18: #{discrimination_forward.1} parent=1 // pred_check
      _
    $region19: #{discrimination_forward.1} parent=1 // pred_check_branch
      %24 = sbr.rel (0) target = $region21
    $region20: #{discrimination_forward.1} parent=1 // pred_region
      _
    $region21: #{discrimination_forward.1} parent=1 // pred_fallthru
      _
    // Predicated region
    $region22: #{discrimination_forward.1} parent=1 // pred_check
      _
    $region23: #{discrimination_forward.1} parent=1 // pred_check_branch
      %26 = sbr.rel (0) target = $region25
    $region24: #{discrimination_forward.1} parent=1 // pred_region
      _
    $region25: #{discrimination_forward.1} parent=1 // pred_fallthru
      _
    // Predicated region
    $region26: #{discrimination_forward.1} parent=1 // pred_check
      _
    $region27: #{discrimination_forward.1} parent=1 // pred_check_branch
      %28 = sbr.rel (0) target = $region29
    $region28: #{discrimination_forward.1} parent=1 // pred_region
      _
    $region29: #{discrimination_forward.1} parent=1 // pred_fallthru
      _
    // Predicated region
    $region30: #{discrimination_forward.1} parent=1 // pred_check
      _
    $region31: #{discrimination_forward.1} parent=1 // pred_check_branch
      %30 = sbr.rel (0) target = $region33
    $region32: #{discrimination_forward.1} parent=1 // pred_region
      _
    $region33: #{discrimination_forward.1} parent=1 // pred_fallthru
      _
    // Predicated region
    $region34: #{discrimination_forward.1} parent=1 // pred_check
      _
    $region35: #{discrimination_forward.1} parent=1 // pred_check_branch
      %32 = sbr.rel (0) target = $region37
    $region36: #{discrimination_forward.1} parent=1 // pred_region
      _
    $region37: #{discrimination_forward.1} parent=1 // pred_fallthru
      _
    %v33 = vld [vmem:[%s0] sm:$0xf]
    %v34 = vld [vmem:[%s0 + $0x4] sm:$0xf]
    %v35 = vld [vmem:[%s1] sm:$0xf]
    %v36 = vld [vmem:[%s1 + $0x4] sm:$0xf]
    %v37 = vld [vmem:[%s1 + $0x8] sm:$0xf]
    %v38 = vld [vmem:[%s1 + $0xc] sm:$0xf]
    %v39 = vld [vmem:[%s1 + $0x10] sm:$0xf]
    %v40 = vld [vmem:[%s1 + $0x14] sm:$0xf]
    %v41 = vld [vmem:[%s1 + $0x18] sm:$0xf]
    %v42 = vld [vmem:[%s1 + $0x1c] sm:$0xf]
    %v43 = vld [vmem:[%s1 + $0x20] sm:$0xf]
    %v44 = vld [vmem:[%s1 + $0x24] sm:$0xf]
    %v45 = vld [vmem:[%s1 + $0x28] sm:$0xf]
    %v46 = vld [vmem:[%s1 + $0x2c] sm:$0xf]
    %v47 = vld [vmem:[%s1 + $0x30] sm:$0xf]
    %v48 = vld [vmem:[%s1 + $0x34] sm:$0xf]
    %v49 = vld [vmem:[%s1 + $0x38] sm:$0xf]
    %v50 = vld [vmem:[%s1 + $0x3c] sm:$0xf]
    %v51 = vld [vmem:[%s2] sm:$0x1]
    %v53 = vperm.slane %v51, 0
    %v57 = vunpack.c.l.b16 %v33
    %v58 = vunpack.c.l.b16 %v34
    %v59 = vpack.c.b16 %v58, %v57
    %v77 = vunpack.c.l.b16 %v35
    %v78 = vunpack.c.l.b16 %v36
    %v79 = vunpack.c.l.b16 %v37
    %v80 = vunpack.c.l.b16 %v38
    %v81 = vunpack.c.l.b16 %v39
    %v82 = vunpack.c.l.b16 %v40
    %v83 = vunpack.c.l.b16 %v41
    %v84 = vunpack.c.l.b16 %v42
    %v85 = vunpack.c.l.b16 %v43
    %v86 = vunpack.c.l.b16 %v44
    %v87 = vunpack.c.l.b16 %v45
    %v88 = vunpack.c.l.b16 %v46
    %v89 = vunpack.c.l.b16 %v47
    %v90 = vunpack.c.l.b16 %v48
    %v91 = vunpack.c.l.b16 %v49
    %v92 = vunpack.c.l.b16 %v50
    %v93 = vpack.c.b16 %v78, %v77
    %v94 = vpack.c.b16 %v80, %v79
    %v95 = vpack.c.b16 %v82, %v81
    %v96 = vpack.c.b16 %v84, %v83
    %v97 = vpack.c.b16 %v86, %v85
    %v98 = vpack.c.b16 %v88, %v87
    %v99 = vpack.c.b16 %v90, %v89
    %v100 = vpack.c.b16 %v92, %v91
    %109 = vmatpush.bf16.msra.mxu0 %v100
    %110 = vmatpush.bf16.msra.mxu0 %v99
    %111 = vmatpush.bf16.msra.mxu0 %v98
    %112 = vmatpush.bf16.msra.mxu0 %v97
    %113 = vmatpush.bf16.msra.mxu0 %v96
    %114 = vmatpush.bf16.msra.mxu0 %v95
    %115 = vmatpush.bf16.msra.mxu0 %v94
    %116 = vmatpush.bf16.msra.mxu0 %v93
    %117 = vmatmul.bf16.gmra.mxu0 %v59
    %v118 = vpop.f32.mrf.mxu0
    %v119 = vadd.f32 %v53, %v118
    %v120 = vpop.f32.mrf.mxu0
    %v121 = vadd.f32 %v53, %v120
    %122 = vdwg.mxu0
    %v123 = vmul.f32 %v119, 0.22916667
    %v124 = vmul.f32 %v121, 0.22916667
    %v125 = vmax.f32 %v119, %v123
    %v126 = vmax.f32 %v121, %v124
    %v127 = vpack.c.bf16 %v126, %v125
    %v128 = vld [vmem:[%s3] sm:$0xf]
    %v129 = vld [vmem:[%s3 + $0x4] sm:$0xf]
    %v130 = vld [vmem:[%s3 + $0x8] sm:$0xf]
    %v131 = vld [vmem:[%s3 + $0xc] sm:$0xf]
    %v132 = vld [vmem:[%s3 + $0x10] sm:$0xf]
    %v133 = vld [vmem:[%s3 + $0x14] sm:$0xf]
    %v134 = vld [vmem:[%s3 + $0x18] sm:$0xf]
    %v135 = vld [vmem:[%s3 + $0x1c] sm:$0xf]
    %v136 = vld [vmem:[%s3 + $0x20] sm:$0xf]
    %v137 = vld [vmem:[%s3 + $0x24] sm:$0xf]
    %v138 = vld [vmem:[%s3 + $0x28] sm:$0xf]
    %v139 = vld [vmem:[%s3 + $0x2c] sm:$0xf]
    %v140 = vld [vmem:[%s3 + $0x30] sm:$0xf]
    %v141 = vld [vmem:[%s3 + $0x34] sm:$0xf]
    %v142 = vld [vmem:[%s3 + $0x38] sm:$0xf]
    %v143 = vld [vmem:[%s3 + $0x3c] sm:$0xf]
    %v144 = vld [vmem:[%s4] sm:$0x1]
    %v146 = vperm.slane %v144, 0
    %v164 = vunpack.c.l.b16 %v128
    %v165 = vunpack.c.l.b16 %v129
    %v166 = vunpack.c.l.b16 %v130
    %v167 = vunpack.c.l.b16 %v131
    %v168 = vunpack.c.l.b16 %v132
    %v169 = vunpack.c.l.b16 %v133
    %v170 = vunpack.c.l.b16 %v134
    %v171 = vunpack.c.l.b16 %v135
    %v172 = vunpack.c.l.b16 %v136
    %v173 = vunpack.c.l.b16 %v137
    %v174 = vunpack.c.l.b16 %v138
    %v175 = vunpack.c.l.b16 %v139
    %v176 = vunpack.c.l.b16 %v140
    %v177 = vunpack.c.l.b16 %v141
    %v178 = vunpack.c.l.b16 %v142
    %v179 = vunpack.c.l.b16 %v143
    %v180 = vpack.c.b16 %v165, %v164
    %v181 = vpack.c.b16 %v167, %v166
    %v182 = vpack.c.b16 %v169, %v168
    %v183 = vpack.c.b16 %v171, %v170
    %v184 = vpack.c.b16 %v173, %v172
    %v185 = vpack.c.b16 %v175, %v174
    %v186 = vpack.c.b16 %v177, %v176
    %v187 = vpack.c.b16 %v179, %v178
    %196 = vmatpush.bf16.msra.mxu0 %v187
    %197 = vmatpush.bf16.msra.mxu0 %v186
    %198 = vmatpush.bf16.msra.mxu0 %v185
    %199 = vmatpush.bf16.msra.mxu0 %v184
    %200 = vmatpush.bf16.msra.mxu0 %v183
    %201 = vmatpush.bf16.msra.mxu0 %v182
    %202 = vmatpush.bf16.msra.mxu0 %v181
    %203 = vmatpush.bf16.msra.mxu0 %v180
    %204 = vmatmul.bf16.gmra.mxu0 %v127
    %v205 = vpop.f32.mrf.mxu0
    %v206 = vadd.f32 %v146, %v205
    %v207 = vpop.f32.mrf.mxu0
    %v208 = vadd.f32 %v146, %v207
    %209 = vdwg.mxu0
    %v210 = vmul.f32 %v206, 0.22916667
    %v211 = vmul.f32 %v208, 0.22916667
    %v212 = vmax.f32 %v206, %v210
    %v213 = vmax.f32 %v208, %v211
    %v214 = vpack.c.bf16 %v213, %v212
    %v215 = vld [vmem:[%s5] sm:$0xf]
    %v216 = vld [vmem:[%s5 + $0x4] sm:$0xf]
    %v217 = vld [vmem:[%s5 + $0x8] sm:$0xf]
    %v218 = vld [vmem:[%s5 + $0xc] sm:$0xf]
    %v219 = vld [vmem:[%s5 + $0x10] sm:$0xf]
    %v220 = vld [vmem:[%s5 + $0x14] sm:$0xf]
    %v221 = vld [vmem:[%s5 + $0x18] sm:$0xf]
    %v222 = vld [vmem:[%s5 + $0x1c] sm:$0xf]
    %v223 = vld [vmem:[%s5 + $0x20] sm:$0xf]
    %v224 = vld [vmem:[%s5 + $0x24] sm:$0xf]
    %v225 = vld [vmem:[%s5 + $0x28] sm:$0xf]
    %v226 = vld [vmem:[%s5 + $0x2c] sm:$0xf]
    %v227 = vld [vmem:[%s5 + $0x30] sm:$0xf]
    %v228 = vld [vmem:[%s5 + $0x34] sm:$0xf]
    %v229 = vld [vmem:[%s5 + $0x38] sm:$0xf]
    %v230 = vld [vmem:[%s5 + $0x3c] sm:$0xf]
    %v231 = vld [vmem:[%s6] sm:$0x1]
    %v233 = vperm.slane %v231, 0
    %v251 = vunpack.c.l.b16 %v215
    %v252 = vunpack.c.l.b16 %v216
    %v253 = vunpack.c.l.b16 %v217
    %v254 = vunpack.c.l.b16 %v218
    %v255 = vunpack.c.l.b16 %v219
    %v256 = vunpack.c.l.b16 %v220
    %v257 = vunpack.c.l.b16 %v221
    %v258 = vunpack.c.l.b16 %v222
    %v259 = vunpack.c.l.b16 %v223
    %v260 = vunpack.c.l.b16 %v224
    %v261 = vunpack.c.l.b16 %v225
    %v262 = vunpack.c.l.b16 %v226
    %v263 = vunpack.c.l.b16 %v227
    %v264 = vunpack.c.l.b16 %v228
    %v265 = vunpack.c.l.b16 %v229
    %v266 = vunpack.c.l.b16 %v230
    %v267 = vpack.c.b16 %v252, %v251
    %v268 = vpack.c.b16 %v254, %v253
    %v269 = vpack.c.b16 %v256, %v255
    %v270 = vpack.c.b16 %v258, %v257
    %v271 = vpack.c.b16 %v260, %v259
    %v272 = vpack.c.b16 %v262, %v261
    %v273 = vpack.c.b16 %v264, %v263
    %v274 = vpack.c.b16 %v266, %v265
    %283 = vmatpush.bf16.msra.mxu0 %v274
    %284 = vmatpush.bf16.msra.mxu0 %v273
    %285 = vmatpush.bf16.msra.mxu0 %v272
    %286 = vmatpush.bf16.msra.mxu0 %v271
    %287 = vmatpush.bf16.msra.mxu0 %v270
    %288 = vmatpush.bf16.msra.mxu0 %v269
    %289 = vmatpush.bf16.msra.mxu0 %v268
    %290 = vmatpush.bf16.msra.mxu0 %v267
    %291 = vmatmul.bf16.gmra.mxu0 %v214
    %v292 = vpop.f32.mrf.mxu0
    %v293 = vadd.f32 %v233, %v292
    %v294 = vpop.f32.mrf.mxu0
    %v295 = vadd.f32 %v233, %v294
    %296 = vdwg.mxu0
    %v297 = vmul.f32 %v293, 0.22916667
    %v298 = vmul.f32 %v295, 0.22916667
    %v299 = vmax.f32 %v293, %v297
    %v300 = vmax.f32 %v295, %v298
    %v301 = vpack.c.bf16 %v300, %v299
    %v302 = vld [vmem:[%s7] sm:$0xf]
    %v303 = vld [vmem:[%s7 + $0x4] sm:$0xf]
    %v304 = vld [vmem:[%s7 + $0x8] sm:$0xf]
    %v305 = vld [vmem:[%s7 + $0xc] sm:$0xf]
    %v306 = vld [vmem:[%s7 + $0x10] sm:$0xf]
    %v307 = vld [vmem:[%s7 + $0x14] sm:$0xf]
    %v308 = vld [vmem:[%s7 + $0x18] sm:$0xf]
    %v309 = vld [vmem:[%s7 + $0x1c] sm:$0xf]
    %v310 = vld [vmem:[%s7 + $0x20] sm:$0xf]
    %v311 = vld [vmem:[%s7 + $0x24] sm:$0xf]
    %v312 = vld [vmem:[%s7 + $0x28] sm:$0xf]
    %v313 = vld [vmem:[%s7 + $0x2c] sm:$0xf]
    %v314 = vld [vmem:[%s7 + $0x30] sm:$0xf]
    %v315 = vld [vmem:[%s7 + $0x34] sm:$0xf]
    %v316 = vld [vmem:[%s7 + $0x38] sm:$0xf]
    %v317 = vld [vmem:[%s7 + $0x3c] sm:$0xf]
    %v318 = vld [vmem:[%s8] sm:$0x1]
    %v320 = vperm.slane %v318, 0
    %v338 = vunpack.c.l.b16 %v302
    %v339 = vunpack.c.l.b16 %v303
    %v340 = vunpack.c.l.b16 %v304
    %v341 = vunpack.c.l.b16 %v305
    %v342 = vunpack.c.l.b16 %v306
    %v343 = vunpack.c.l.b16 %v307
    %v344 = vunpack.c.l.b16 %v308
    %v345 = vunpack.c.l.b16 %v309
    %v346 = vunpack.c.l.b16 %v310
    %v347 = vunpack.c.l.b16 %v311
    %v348 = vunpack.c.l.b16 %v312
    %v349 = vunpack.c.l.b16 %v313
    %v350 = vunpack.c.l.b16 %v314
    %v351 = vunpack.c.l.b16 %v315
    %v352 = vunpack.c.l.b16 %v316
    %v353 = vunpack.c.l.b16 %v317
    %v354 = vpack.c.b16 %v339, %v338
    %v355 = vpack.c.b16 %v341, %v340
    %v356 = vpack.c.b16 %v343, %v342
    %v357 = vpack.c.b16 %v345, %v344
    %v358 = vpack.c.b16 %v347, %v346
    %v359 = vpack.c.b16 %v349, %v348
    %v360 = vpack.c.b16 %v351, %v350
    %v361 = vpack.c.b16 %v353, %v352
    %370 = vmatpush.bf16.msra.mxu0 %v361
    %371 = vmatpush.bf16.msra.mxu0 %v360
    %372 = vmatpush.bf16.msra.mxu0 %v359
    %373 = vmatpush.bf16.msra.mxu0 %v358
    %374 = vmatpush.bf16.msra.mxu0 %v357
    %375 = vmatpush.bf16.msra.mxu0 %v356
    %376 = vmatpush.bf16.msra.mxu0 %v355
    %377 = vmatpush.bf16.msra.mxu0 %v354
    %378 = vmatmul.bf16.gmra.mxu0 %v301
    %v379 = vpop.f32.mrf.mxu0
    %v380 = vadd.f32 %v320, %v379
    %v381 = vpop.f32.mrf.mxu0
    %v382 = vadd.f32 %v320, %v381
    %383 = vdwg.mxu0
    %v384 = vmul.f32 %v380, 0.22916667
    %v385 = vmul.f32 %v382, 0.22916667
    %v386 = vmax.f32 %v380, %v384
    %v387 = vmax.f32 %v382, %v385
    %v388 = vunpack.c.l.bf16 %v33
    %v389 = vunpack.c.l.bf16 %v34
    %v390 = vrot.slane %v386, 4
    %v391 = vmax.f32 %v386, %v390
    %v392 = vrot.slane %v391, 2
    %v393 = vmax.f32 %v391, %v392
    %v394 = vrot.slane %v393, 1
    %v395 = vmax.f32 %v393, %v394
    %v396 = vrot.slane %v387, 4
    %v397 = vmax.f32 %v387, %v396
    %v398 = vrot.slane %v397, 2
    %v399 = vmax.f32 %v397, %v398
    %v400 = vrot.slane %v399, 1
    %v401 = vmax.f32 %v399, %v400
    %v402 = vsub.f32 %v386, %v395
    %v403 = vsub.f32 %v387, %v401
    %v404 = vmul.f32 %v402, 1.442695
    %v405 = vpow.pop %v404
    %v406 = vmul.f32 %v403, 1.442695
    %v407 = vpow.pop %v406
    %v408 = vrot.slane %v405, 4
    %v409 = vadd.f32 %v405, %v408
    %v410 = vrot.slane %v409, 2
    %v411 = vadd.f32 %v409, %v410
    %v412 = vrot.slane %v411, 1
    %v413 = vadd.f32 %v411, %v412
    %v414 = vrot.slane %v407, 4
    %v415 = vadd.f32 %v407, %v414
    %v416 = vrot.slane %v415, 2
    %v417 = vadd.f32 %v415, %v416
    %v418 = vrot.slane %v417, 1
    %v419 = vadd.f32 %v417, %v418
    %v420 = vmul.f32 %v405, %v388
    %v421 = vmul.f32 %v407, %v389
    %v422 = vrot.slane %v420, 4
    %v423 = vadd.f32 %v420, %v422
    %v424 = vrot.slane %v423, 2
    %v425 = vadd.f32 %v423, %v424
    %v426 = vrot.slane %v425, 1
    %v427 = vadd.f32 %v425, %v426
    %v428 = vrot.slane %v421, 4
    %v429 = vadd.f32 %v421, %v428
    %v430 = vrot.slane %v429, 2
    %v431 = vadd.f32 %v429, %v430
    %v432 = vrot.slane %v431, 1
    %v433 = vadd.f32 %v431, %v432
    %v434 = vrcp.pop %v413
    %v435 = vmul.f32 %v413, %v434
    %v436 = vsub.f32 1.0, %v435
    %v437 = vmul.f32 %v434, %v436
    %v438 = vadd.f32 %v434, %v437
    %vm439 = vweird.f32 %v413
    %vm440 = vweird.f32 %v434
    %vm441 = vmor %vm439, %vm440
    %v442 = vsel %vm441, %v434, %v438
    %v443 = vand.u32 2147483647, %v413
    %vm444 = vcmp.eq.f32.partialorder %v443, 8.507059e+37
    %v445 = vand.u32 %v413, 2147483648
    %v446 = vor.u32 1.1754944e-38, %v445
    %v447 = vsel %vm444, %v446, %v442
    %v448 = vmul.f32 %v427, %v447
    %v449 = vrcp.pop %v419
    %v450 = vmul.f32 %v419, %v449
    %v451 = vsub.f32 1.0, %v450
    %v452 = vmul.f32 %v449, %v451
    %v453 = vadd.f32 %v449, %v452
    %vm454 = vweird.f32 %v419
    %vm455 = vweird.f32 %v449
    %vm456 = vmor %vm454, %vm455
    %v457 = vsel %vm456, %v449, %v453
    %v458 = vand.u32 2147483647, %v419
    %vm459 = vcmp.eq.f32.partialorder %v458, 8.507059e+37
    %v460 = vand.u32 %v419, 2147483648
    %v461 = vor.u32 1.1754944e-38, %v460
    %v462 = vsel %vm459, %v461, %v457
    %v463 = vmul.f32 %v433, %v462
    %v464 = vmul.f32 %v448, %v448
    %v465 = vmul.f32 %v463, %v463
    %vm468 = vcmask 1041409
    %v469 = vsel %vm468, %v465, %v464
    %vm471 = vcmask 1041408
    %v472 = vsel %vm471, %v469, 0.0
    %473 = vadd.xlane.f32.xlu0 %v472
    %v474 = vpop.xlane.xlu0 %473
    %v475 = vmax.f32 %v474, 1e-24
    %v476 = vrsqrt.pop %v475
    %v477 = vmul.f32 %v476, %v475
    %v478 = vmul.f32 %v477, %v476
    %v479 = vmul.f32 0.5, %v478
    %v480 = vsub.f32 1.5, %v479
    %v481 = vmul.f32 %v476, %v480
    %vm482 = vweird.f32 %v475
    %vm483 = vweird.f32 %v476
    %vm484 = vmor %vm482, %vm483
    %v485 = vsel %vm484, %v476, %v481
    %v487 = vrot.slane %v485, 1
    %v490 = vmul.f32 %v448, %v485
    %v491 = vmul.f32 %v463, %v487
    %v494 = vrot.slane %v491, 7
    %v495 = vsel %vm468, %v494, %v490
    %497 = vst [vmem:[#allocation2] sm:$0x3] %v495
    // Predicated region
    $region38: #{discrimination_forward.1} parent=1 // pred_check
      _
    $region39: #{discrimination_forward.1} parent=1 // pred_check_branch
      %499 = sbr.rel (0) target = $region41
    $region40: #{discrimination_forward.1} parent=1 // pred_region
      %501 = vsyncadd [#allocation3], 0
      %s503 = sshll.u32 [#allocation2], 4
      %s504 = int_to_ptr.vmem [resolvable:$true] %s503
      %s505 = sshll.u32 %s9, 4
      %s506 = int_to_ptr.hbm [resolvable:$true] %s505
      %508 = dma.vmem_to_hbm [thread:$0]  %s504, 32, %s506, [#allocation3]
    $region41: #{discrimination_forward.1} parent=1 // pred_fallthru
      _
    // Predicated region
    $region42: #{discrimination_forward.1} parent=1 // pred_check
      _
    $region43: #{discrimination_forward.1} parent=1 // pred_check_branch
      %510 = sbr.rel (0) target = $region45
    $region44: #{discrimination_forward.1} parent=1 // pred_region
      %512 = dma.done [#allocation3], 32
    $region45: #{discrimination_forward.1} parent=1 // pred_fallthru
      _
    %513 = vsyncpa [#allocation3], 1

</llo_original>
